<compile_context>
chip_gen: v7x
topology: tpu7x:2x2x1
jax: 0.10.0
libtpu: 0.0.40
codegen_flags: <defaults>
</compile_context>

<pallas_src>
import math

import jax
import jax.numpy as jnp
import numpy as np
from jax import lax
from jax.experimental import pallas as pl
from jax.experimental.pallas import tpu as pltpu


def adj_kernel(roi_ref, sup_ref, pe_ref, wq_ref, bq_ref, wk_ref, bk_ref,
               wg_ref, bg_ref, adj_ref, mean_ref, aff_flat_ref):
    N, D = roi_ref.shape
    M = sup_ref.shape[0]
    G = wg_ref.shape[0]

    # --- Q / K projections (tiny MXU matmuls, f32 accumulation). ---
    q = jnp.dot(roi_ref[...], wq_ref[...],
                preferred_element_type=jnp.float32) + bq_ref[...]
    k = jnp.dot(sup_ref[...], wk_ref[...],
                preferred_element_type=jnp.float32) + bk_ref[...]

    # Group=1 scaled affinity [N, M]; contract on the last dim of both
    # operands so no explicit transpose of k is materialized.
    aff = lax.dot_general(q, k, (((1,), (1,)), ((), ())),
                          preferred_element_type=jnp.float32)
    aff = aff * (1.0 / math.sqrt(D))

    # Manual sublane->lane relayout of aff [N, M] into a [1, N*M] row so it
    # broadcasts over the G sublanes of the position tensor below.
    for n in range(N):                                  # static unroll, N tiny stores
        aff_flat_ref[:, pl.ds(n * M, M)] = aff[n:n + 1, :]
    e = jnp.exp(-aff_flat_ref[...])                     # [1, N*M]; 256 EUP exps

    # 1x1 conv == Wg[G,E] @ PE[E, N*M] -> [G, N*M]: G on sublanes, N*M on
    # lanes, so all following elementwise / EUP work runs on full vregs.
    pos = jnp.dot(wg_ref[...], pe_ref[...],
                  preferred_element_type=jnp.float32) + bg_ref[...]
    p = jnp.maximum(pos, 0.0) + 1e-6                    # [G, N*M]

    # sigmoid(log(p) + aff) == p / (p + exp(-aff))  (log eliminated).
    sig = p / (p + e)                                   # [G, N*M]

    s = jnp.sum(sig, axis=0, keepdims=True)             # [1, N*M] sublane reduce
    # mean > 0.5  <=>  sum > G/2  (and 1/G is a power of two -> exact mean).
    adj_ref[...] = jnp.where(s > (0.5 * G), 1.0, 0.0).astype(adj_ref.dtype)
    mean_ref[...] = (s * (1.0 / G)).astype(mean_ref.dtype)


def adj_generator_forward(ref_feat, sup_feat, position_embedding, params,
                          *, return_mean=False):
    """ref_feat [N, D], sup_feat [M, D], position_embedding [1, E, N, M] (NCHW)."""
    wq, bq, wk, bk, wg, bg = params
    N = ref_feat.shape[0]
    M = sup_feat.shape[0]
    E = position_embedding.shape[1]
    # NCHW [1, E, N, M] -> [E, N*M]: contiguous reshape, no transpose / copy.
    pe = position_embedding.reshape(E, N * M)

    vmem = pl.BlockSpec(memory_space=pltpu.MemorySpace.VMEM)
    adj_flat, mean_flat = pl.pallas_call(
        adj_kernel,
        out_shape=(jax.ShapeDtypeStruct((1, N * M), jnp.float32),
                   jax.ShapeDtypeStruct((1, N * M), jnp.float32)),
        in_specs=[vmem] * 9,
        out_specs=(vmem, vmem),
        scratch_shapes=[pltpu.VMEM((1, N * M), jnp.float32)],
    )(ref_feat, sup_feat, pe, wq, bq, wk, bk, wg, bg)
    # TODO(synk): if N*M / batch count grows, tile PE over a grid with
    # dimension_semantics=("parallel",) (v7x megacore + VMEM budgeting) instead
    # of this single gridless call.
    adj = adj_flat.reshape(N, M)
    if return_mean:
        return adj, mean_flat.reshape(N, M)
    return adj


def reference_forward(ref_feat, sup_feat, position_embedding, params):
    """Plain-JAX mirror of the PyTorch forward (group=1), log/sigmoid form."""
    wq, bq, wk, bk, wg, bg = params
    N, D = ref_feat.shape
    M = sup_feat.shape[0]
    E = position_embedding.shape[1]
    hp = lax.Precision.HIGHEST
    q = jnp.dot(ref_feat, wq, precision=hp) + bq
    k = jnp.dot(sup_feat, wk, precision=hp) + bk
    aff = jnp.dot(q, k.T, precision=hp) / math.sqrt(D)              # [N, M]
    pe = position_embedding.reshape(E, N * M)
    pos = jnp.maximum(jnp.dot(wg, pe, precision=hp) + bg, 0.0)      # [G, N*M]
    pos = pos.reshape(-1, N, M)                                     # [G, N, M]
    weighted = jnp.log(pos + 1e-6) + aff[None, :, :]
    mean = jax.nn.sigmoid(weighted).mean(axis=0)                    # [N, M]
    adj = jnp.where(mean > 0.5, 1.0, 0.0)
    return adj, mean


def init_params(key, feat_dim, embed_dim, groups):
    """Deterministic synthetic init matching the PyTorch module's shapes.

    Wq / Wk: nn.Linear(feat_dim, feat_dim), kaiming_uniform(a=1), bias=0
             (stored pre-transposed so the kernel computes x @ W).
    Wg:      nn.Conv2d(embed_dim, groups, 1), default PyTorch init, kept in
             its native [groups, embed_dim] conv layout; bias as [groups, 1].
    """
    kq, kk, kg, kgb = jax.random.split(key, 4)
    # kaiming_uniform_(a=1): bound = sqrt(6 / ((1 + a^2) * fan_in)) = sqrt(3/fan_in)
    bound_fc = math.sqrt(3.0 / feat_dim)
    wq = jax.random.uniform(kq, (feat_dim, feat_dim), jnp.float32,
                            -bound_fc, bound_fc).T
    wk = jax.random.uniform(kk, (feat_dim, feat_dim), jnp.float32,
                            -bound_fc, bound_fc).T
    bq = jnp.zeros((1, feat_dim), jnp.float32)
    bk = jnp.zeros((1, feat_dim), jnp.float32)
    # Conv2d(embed_dim -> groups, 1x1): weight [G, E, 1, 1] -> [G, E]
    bound_g = 1.0 / math.sqrt(embed_dim)
    wg = jax.random.uniform(kg, (groups, embed_dim), jnp.float32,
                            -bound_g, bound_g)
    bg = jax.random.uniform(kgb, (groups, 1), jnp.float32, -bound_g, bound_g)
    return (wq, bq, wk, bk, wg, bg)


if __name__ == "__main__":
    # Shapes implied by the module: feat_dim D, embed_dim E=64, G=16 conv groups.
    N, M, D, E, G = 16, 16, 64, 64, 16

    key = jax.random.PRNGKey(0)
    k_roi, k_sup, k_pe, k_par = jax.random.split(key, 4)

    ref_feat = jax.random.normal(k_roi, (N, D), jnp.float32)                 # roi_feat
    sup_feat = jax.random.normal(k_sup, (M, D), jnp.float32)                 # support feats
    position_embedding = jax.random.normal(k_pe, (1, E, N, M), jnp.float32)  # NCHW

    params = init_params(k_par, feat_dim=D, embed_dim=E, groups=G)

    adj, mean = adj_generator_forward(ref_feat, sup_feat, position_embedding,
                                      params, return_mean=True)
    adj = jax.block_until_ready(adj)

    adj_want, mean_want = reference_forward(ref_feat, sup_feat,
                                            position_embedding, params)

    adj_np, mean_np = np.asarray(adj), np.asarray(mean)
    adj_want_np, mean_want_np = np.asarray(adj_want), np.asarray(mean_want)

    # Pre-threshold group-mean must match closely; the binary adj must match
    # exactly except (at most) on elements whose mean sits on the 0.5 decision
    # boundary, where the algebraic sigmoid rewrite / MXU rounding can
    # legitimately flip the comparison.
    np.testing.assert_allclose(mean_np, mean_want_np, rtol=1e-3, atol=1e-3)
    boundary = np.abs(mean_want_np - 0.5) <= 1e-3
    mismatch = adj_np != adj_want_np
    if np.any(mismatch & ~boundary):
        raise AssertionError("adj mismatch away from the 0.5 decision boundary")

    print("KERNEL_OK")
</pallas_src>

<mosaic_0001>
module attributes {stable_mosaic.version = 11 : i64} {
  func.func @adj_kernel(%arg0: memref<16x64xf32, #tpu.memory_space<vmem>>, %arg1: memref<16x64xf32, #tpu.memory_space<vmem>>, %arg2: memref<64x256xf32, #tpu.memory_space<vmem>>, %arg3: memref<64x64xf32, #tpu.memory_space<vmem>>, %arg4: memref<1x64xf32, #tpu.memory_space<vmem>>, %arg5: memref<64x64xf32, #tpu.memory_space<vmem>>, %arg6: memref<1x64xf32, #tpu.memory_space<vmem>>, %arg7: memref<16x64xf32, #tpu.memory_space<vmem>>, %arg8: memref<16x1xf32, #tpu.memory_space<vmem>>, %arg9: memref<1x256xf32, #tpu.memory_space<vmem>>, %arg10: memref<1x256xf32, #tpu.memory_space<vmem>>, %arg11: memref<1x256xf32, #tpu.memory_space<vmem>>) attributes {dimension_semantics = [], scalar_prefetch = 0 : i64, scratch_operands = 1 : i64, tpu.core_type = #tpu.core_type<tc>} {
    %c0 = arith.constant 0 : index
    %c0_0 = arith.constant 0 : index
    %0 = vector.load %arg0[%c0, %c0_0] : memref<16x64xf32, #tpu.memory_space<vmem>>, vector<16x64xf32>
    %c0_1 = arith.constant 0 : index
    %c0_2 = arith.constant 0 : index
    %1 = vector.load %arg3[%c0_1, %c0_2] : memref<64x64xf32, #tpu.memory_space<vmem>>, vector<64x64xf32>
    %cst = arith.constant dense<0.000000e+00> : vector<16x64xf32>
    %2 = tpu.matmul %0, %1, %cst {dimension_numbers = #tpu.dot_dimension_numbers<[1], [0], [0], [1], [0, 0, 1, 1], [], []>} : vector<16x64xf32>, vector<64x64xf32>, vector<16x64xf32> -> vector<16x64xf32>
    %c0_3 = arith.constant 0 : index
    %c0_4 = arith.constant 0 : index
    %3 = vector.load %arg4[%c0_3, %c0_4] : memref<1x64xf32, #tpu.memory_space<vmem>>, vector<1x64xf32>
    %4 = vector.broadcast %3 : vector<1x64xf32> to vector<16x64xf32>
    %5 = arith.addf %2, %4 : vector<16x64xf32>
    %c0_5 = arith.constant 0 : index
    %c0_6 = arith.constant 0 : index
    %6 = vector.load %arg1[%c0_5, %c0_6] : memref<16x64xf32, #tpu.memory_space<vmem>>, vector<16x64xf32>
    %c0_7 = arith.constant 0 : index
    %c0_8 = arith.constant 0 : index
    %7 = vector.load %arg5[%c0_7, %c0_8] : memref<64x64xf32, #tpu.memory_space<vmem>>, vector<64x64xf32>
    %cst_9 = arith.constant dense<0.000000e+00> : vector<16x64xf32>
    %8 = tpu.matmul %6, %7, %cst_9 {dimension_numbers = #tpu.dot_dimension_numbers<[1], [0], [0], [1], [0, 0, 1, 1], [], []>} : vector<16x64xf32>, vector<64x64xf32>, vector<16x64xf32> -> vector<16x64xf32>
    %c0_10 = arith.constant 0 : index
    %c0_11 = arith.constant 0 : index
    %9 = vector.load %arg6[%c0_10, %c0_11] : memref<1x64xf32, #tpu.memory_space<vmem>>, vector<1x64xf32>
    %10 = vector.broadcast %9 : vector<1x64xf32> to vector<16x64xf32>
    %11 = arith.addf %8, %10 : vector<16x64xf32>
    %cst_12 = arith.constant dense<0.000000e+00> : vector<16x16xf32>
    %12 = tpu.matmul %5, %11, %cst_12 {dimension_numbers = #tpu.dot_dimension_numbers<[1], [1], [0], [0], [0, 0, 1, 0], [], []>} : vector<16x64xf32>, vector<16x64xf32>, vector<16x16xf32> -> vector<16x16xf32>
    %cst_13 = arith.constant 1.250000e-01 : f32
    %13 = vector.broadcast %cst_13 : f32 to vector<16x16xf32>
    %14 = arith.mulf %12, %13 : vector<16x16xf32>
    %15 = vector.extract_strided_slice %14 {offsets = [0, 0], sizes = [1, 16], strides = [1, 1]} : vector<16x16xf32> to vector<1x16xf32>
    %c0_14 = arith.constant 0 : index
    %c0_15 = arith.constant 0 : index
    %16 = vector.load %arg11[%c0_14, %c0_15] : memref<1x256xf32, #tpu.memory_space<vmem>>, vector<1x16xf32>
    tpu.vector_store %arg11[%c0_14, %c0_15], %15 {strides = array<i32>} : memref<1x256xf32, #tpu.memory_space<vmem>>, vector<1x16xf32>,
    %17 = vector.extract_strided_slice %14 {offsets = [1, 0], sizes = [1, 16], strides = [1, 1]} : vector<16x16xf32> to vector<1x16xf32>
    %c0_16 = arith.constant 0 : index
    %c16 = arith.constant 16 : index
    %18 = vector.load %arg11[%c0_16, %c16] : memref<1x256xf32, #tpu.memory_space<vmem>>, vector<1x16xf32>
    tpu.vector_store %arg11[%c0_16, %c16], %17 {strides = array<i32>} : memref<1x256xf32, #tpu.memory_space<vmem>>, vector<1x16xf32>,
    %19 = vector.extract_strided_slice %14 {offsets = [2, 0], sizes = [1, 16], strides = [1, 1]} : vector<16x16xf32> to vector<1x16xf32>
    %c0_17 = arith.constant 0 : index
    %c32 = arith.constant 32 : index
    %20 = vector.load %arg11[%c0_17, %c32] : memref<1x256xf32, #tpu.memory_space<vmem>>, vector<1x16xf32>
    tpu.vector_store %arg11[%c0_17, %c32], %19 {strides = array<i32>} : memref<1x256xf32, #tpu.memory_space<vmem>>, vector<1x16xf32>,
    %21 = vector.extract_strided_slice %14 {offsets = [3, 0], sizes = [1, 16], strides = [1, 1]} : vector<16x16xf32> to vector<1x16xf32>
    %c0_18 = arith.constant 0 : index
    %c48 = arith.constant 48 : index
    %22 = vector.load %arg11[%c0_18, %c48] : memref<1x256xf32, #tpu.memory_space<vmem>>, vector<1x16xf32>
    tpu.vector_store %arg11[%c0_18, %c48], %21 {strides = array<i32>} : memref<1x256xf32, #tpu.memory_space<vmem>>, vector<1x16xf32>,
    %23 = vector.extract_strided_slice %14 {offsets = [4, 0], sizes = [1, 16], strides = [1, 1]} : vector<16x16xf32> to vector<1x16xf32>
    %c0_19 = arith.constant 0 : index
    %c64 = arith.constant 64 : index
    %24 = vector.load %arg11[%c0_19, %c64] : memref<1x256xf32, #tpu.memory_space<vmem>>, vector<1x16xf32>
    tpu.vector_store %arg11[%c0_19, %c64], %23 {strides = array<i32>} : memref<1x256xf32, #tpu.memory_space<vmem>>, vector<1x16xf32>,
    %25 = vector.extract_strided_slice %14 {offsets = [5, 0], sizes = [1, 16], strides = [1, 1]} : vector<16x16xf32> to vector<1x16xf32>
    %c0_20 = arith.constant 0 : index
    %c80 = arith.constant 80 : index
    %26 = vector.load %arg11[%c0_20, %c80] : memref<1x256xf32, #tpu.memory_space<vmem>>, vector<1x16xf32>
    tpu.vector_store %arg11[%c0_20, %c80], %25 {strides = array<i32>} : memref<1x256xf32, #tpu.memory_space<vmem>>, vector<1x16xf32>,
    %27 = vector.extract_strided_slice %14 {offsets = [6, 0], sizes = [1, 16], strides = [1, 1]} : vector<16x16xf32> to vector<1x16xf32>
    %c0_21 = arith.constant 0 : index
    %c96 = arith.constant 96 : index
    %28 = vector.load %arg11[%c0_21, %c96] : memref<1x256xf32, #tpu.memory_space<vmem>>, vector<1x16xf32>
    tpu.vector_store %arg11[%c0_21, %c96], %27 {strides = array<i32>} : memref<1x256xf32, #tpu.memory_space<vmem>>, vector<1x16xf32>,
    %29 = vector.extract_strided_slice %14 {offsets = [7, 0], sizes = [1, 16], strides = [1, 1]} : vector<16x16xf32> to vector<1x16xf32>
    %c0_22 = arith.constant 0 : index
    %c112 = arith.constant 112 : index
    %30 = vector.load %arg11[%c0_22, %c112] : memref<1x256xf32, #tpu.memory_space<vmem>>, vector<1x16xf32>
    tpu.vector_store %arg11[%c0_22, %c112], %29 {strides = array<i32>} : memref<1x256xf32, #tpu.memory_space<vmem>>, vector<1x16xf32>,
    %31 = vector.extract_strided_slice %14 {offsets = [8, 0], sizes = [1, 16], strides = [1, 1]} : vector<16x16xf32> to vector<1x16xf32>
    %c0_23 = arith.constant 0 : index
    %c128 = arith.constant 128 : index
    %32 = vector.load %arg11[%c0_23, %c128] : memref<1x256xf32, #tpu.memory_space<vmem>>, vector<1x16xf32>
    tpu.vector_store %arg11[%c0_23, %c128], %31 {strides = array<i32>} : memref<1x256xf32, #tpu.memory_space<vmem>>, vector<1x16xf32>,
    %33 = vector.extract_strided_slice %14 {offsets = [9, 0], sizes = [1, 16], strides = [1, 1]} : vector<16x16xf32> to vector<1x16xf32>
    %c0_24 = arith.constant 0 : index
    %c144 = arith.constant 144 : index
    %34 = vector.load %arg11[%c0_24, %c144] : memref<1x256xf32, #tpu.memory_space<vmem>>, vector<1x16xf32>
    tpu.vector_store %arg11[%c0_24, %c144], %33 {strides = array<i32>} : memref<1x256xf32, #tpu.memory_space<vmem>>, vector<1x16xf32>,
    %35 = vector.extract_strided_slice %14 {offsets = [10, 0], sizes = [1, 16], strides = [1, 1]} : vector<16x16xf32> to vector<1x16xf32>
    %c0_25 = arith.constant 0 : index
    %c160 = arith.constant 160 : index
    %36 = vector.load %arg11[%c0_25, %c160] : memref<1x256xf32, #tpu.memory_space<vmem>>, vector<1x16xf32>
    tpu.vector_store %arg11[%c0_25, %c160], %35 {strides = array<i32>} : memref<1x256xf32, #tpu.memory_space<vmem>>, vector<1x16xf32>,
    %37 = vector.extract_strided_slice %14 {offsets = [11, 0], sizes = [1, 16], strides = [1, 1]} : vector<16x16xf32> to vector<1x16xf32>
    %c0_26 = arith.constant 0 : index
    %c176 = arith.constant 176 : index
    %38 = vector.load %arg11[%c0_26, %c176] : memref<1x256xf32, #tpu.memory_space<vmem>>, vector<1x16xf32>
    tpu.vector_store %arg11[%c0_26, %c176], %37 {strides = array<i32>} : memref<1x256xf32, #tpu.memory_space<vmem>>, vector<1x16xf32>,
    %39 = vector.extract_strided_slice %14 {offsets = [12, 0], sizes = [1, 16], strides = [1, 1]} : vector<16x16xf32> to vector<1x16xf32>
    %c0_27 = arith.constant 0 : index
    %c192 = arith.constant 192 : index
    %40 = vector.load %arg11[%c0_27, %c192] : memref<1x256xf32, #tpu.memory_space<vmem>>, vector<1x16xf32>
    tpu.vector_store %arg11[%c0_27, %c192], %39 {strides = array<i32>} : memref<1x256xf32, #tpu.memory_space<vmem>>, vector<1x16xf32>,
    %41 = vector.extract_strided_slice %14 {offsets = [13, 0], sizes = [1, 16], strides = [1, 1]} : vector<16x16xf32> to vector<1x16xf32>
    %c0_28 = arith.constant 0 : index
    %c208 = arith.constant 208 : index
    %42 = vector.load %arg11[%c0_28, %c208] : memref<1x256xf32, #tpu.memory_space<vmem>>, vector<1x16xf32>
    tpu.vector_store %arg11[%c0_28, %c208], %41 {strides = array<i32>} : memref<1x256xf32, #tpu.memory_space<vmem>>, vector<1x16xf32>,
    %43 = vector.extract_strided_slice %14 {offsets = [14, 0], sizes = [1, 16], strides = [1, 1]} : vector<16x16xf32> to vector<1x16xf32>
    %c0_29 = arith.constant 0 : index
    %c224 = arith.constant 224 : index
    %44 = vector.load %arg11[%c0_29, %c224] : memref<1x256xf32, #tpu.memory_space<vmem>>, vector<1x16xf32>
    tpu.vector_store %arg11[%c0_29, %c224], %43 {strides = array<i32>} : memref<1x256xf32, #tpu.memory_space<vmem>>, vector<1x16xf32>,
    %45 = vector.extract_strided_slice %14 {offsets = [15, 0], sizes = [1, 16], strides = [1, 1]} : vector<16x16xf32> to vector<1x16xf32>
    %c0_30 = arith.constant 0 : index
    %c240 = arith.constant 240 : index
    %46 = vector.load %arg11[%c0_30, %c240] : memref<1x256xf32, #tpu.memory_space<vmem>>, vector<1x16xf32>
    tpu.vector_store %arg11[%c0_30, %c240], %45 {strides = array<i32>} : memref<1x256xf32, #tpu.memory_space<vmem>>, vector<1x16xf32>,
    %c0_31 = arith.constant 0 : index
    %c0_32 = arith.constant 0 : index
    %47 = vector.load %arg11[%c0_31, %c0_32] : memref<1x256xf32, #tpu.memory_space<vmem>>, vector<1x256xf32>
    %cst_33 = arith.constant 0.000000e+00 : f32
    %48 = vector.broadcast %cst_33 : f32 to vector<1x256xf32>
    %49 = arith.subf %48, %47 : vector<1x256xf32>
    %50 = math.exp %49 : vector<1x256xf32>
    %c0_34 = arith.constant 0 : index
    %c0_35 = arith.constant 0 : index
    %51 = vector.load %arg7[%c0_34, %c0_35] : memref<16x64xf32, #tpu.memory_space<vmem>>, vector<16x64xf32>
    %c0_36 = arith.constant 0 : index
    %c0_37 = arith.constant 0 : index
    %52 = vector.load %arg2[%c0_36, %c0_37] : memref<64x256xf32, #tpu.memory_space<vmem>>, vector<64x256xf32>
    %cst_38 = arith.constant dense<0.000000e+00> : vector<16x256xf32>
    %53 = tpu.matmul %51, %52, %cst_38 {dimension_numbers = #tpu.dot_dimension_numbers<[1], [0], [0], [1], [0, 0, 1, 1], [], []>} : vector<16x64xf32>, vector<64x256xf32>, vector<16x256xf32> -> vector<16x256xf32>
    %c0_39 = arith.constant 0 : index
    %c0_40 = arith.constant 0 : index
    %54 = vector.load %arg8[%c0_39, %c0_40] : memref<16x1xf32, #tpu.memory_space<vmem>>, vector<16x1xf32>
    %55 = vector.broadcast %54 : vector<16x1xf32> to vector<16x256xf32>
    %56 = arith.addf %53, %55 : vector<16x256xf32>
    %cst_41 = arith.constant 0.000000e+00 : f32
    %57 = vector.broadcast %cst_41 : f32 to vector<16x256xf32>
    %58 = arith.maximumf %56, %57 : vector<16x256xf32>
    %cst_42 = arith.constant 9.99999997E-7 : f32
    %59 = vector.broadcast %cst_42 : f32 to vector<16x256xf32>
    %60 = arith.addf %58, %59 : vector<16x256xf32>
    %61 = vector.broadcast %50 : vector<1x256xf32> to vector<16x256xf32>
    %62 = arith.addf %60, %61 : vector<16x256xf32>
    %63 = arith.divf %60, %62 : vector<16x256xf32>
    %cst_43 = arith.constant dense<0.000000e+00> : vector<256xf32>
    %64 = vector.multi_reduction <add>, %63, %cst_43 [0] : vector<16x256xf32> to vector<256xf32>
    %65 = vector.shape_cast %64 : vector<256xf32> to vector<1x256xf32>
    %cst_44 = arith.constant 8.000000e+00 : f32
    %66 = vector.broadcast %cst_44 : f32 to vector<1x256xf32>
    %67 = arith.cmpf ogt, %65, %66 : vector<1x256xf32>
    %cst_45 = arith.constant 1.000000e+00 : f32
    %cst_46 = arith.constant 0.000000e+00 : f32
    %68 = vector.broadcast %cst_45 : f32 to vector<1x256xf32>
    %69 = vector.broadcast %cst_46 : f32 to vector<1x256xf32>
    %70 = arith.select %67, %68, %69 : vector<1x256xi1>, vector<1x256xf32>
    %c0_47 = arith.constant 0 : index
    %c0_48 = arith.constant 0 : index
    %71 = vector.load %arg9[%c0_47, %c0_48] : memref<1x256xf32, #tpu.memory_space<vmem>>, vector<1x256xf32>
    tpu.vector_store %arg9[%c0_47, %c0_48], %70 {strides = array<i32>} : memref<1x256xf32, #tpu.memory_space<vmem>>, vector<1x256xf32>,
    %cst_49 = arith.constant 6.250000e-02 : f32
    %72 = vector.broadcast %cst_49 : f32 to vector<1x256xf32>
    %73 = arith.mulf %65, %72 : vector<1x256xf32>
    %c0_50 = arith.constant 0 : index
    %c0_51 = arith.constant 0 : index
    %74 = vector.load %arg10[%c0_50, %c0_51] : memref<1x256xf32, #tpu.memory_space<vmem>>, vector<1x256xf32>
    tpu.vector_store %arg10[%c0_50, %c0_51], %73 {strides = array<i32>} : memref<1x256xf32, #tpu.memory_space<vmem>>, vector<1x256xf32>,
    return
  }
}

</mosaic_0001>

<llo_original>
// kernel: tpu_custom_call.1
$region0: #{tpu_custom_call.1}
  #allocation0 [shape = 'u32[]', space=smem, size = 0x4, offset = 0x4, fixed_abs, tag = 'smem constant byte address 0x4 - core index']
  #allocation1 [shape = 'u32[144,128]{1,0:T(1,128)}', space=vmem, size = 0x12000, scoped, tag = 'internal scratch']
  #allocation2 [shape = 'f32[1,256]{1,0:T(1,128)}', space=vmem, size = 0x400, scoped, tag = 'scratch operand']
  %s0 = inlined_call_operand.vmem [shape: f32[16,64], index: 0, kind: input, shape index: {}]
  %s1 = inlined_call_operand.hbm [shape: f32[16,64], index: 1, kind: input, shape index: {}]
  %s2 = inlined_call_operand.hbm [shape: f32[64,256], index: 2, kind: input, shape index: {}]
  %s3 = inlined_call_operand.hbm [shape: f32[64,64], index: 3, kind: input, shape index: {}]
  %s4 = inlined_call_operand.hbm [shape: f32[1,64], index: 4, kind: input, shape index: {}]
  %s5 = inlined_call_operand.hbm [shape: f32[64,64], index: 5, kind: input, shape index: {}]
  %s6 = inlined_call_operand.vmem [shape: f32[1,64], index: 6, kind: input, shape index: {}]
  %s7 = inlined_call_operand.vmem [shape: f32[16,64], index: 7, kind: input, shape index: {}]
  %s8 = inlined_call_operand.vmem [shape: f32[16,1], index: 8, kind: input, shape index: {}]
  %s9 = inlined_call_operand.hbm [shape: f32[1,256], index: 9, kind: output, shape index: {0}]
  %s10 = inlined_call_operand.hbm [shape: f32[1,256], index: 10, kind: output, shape index: {1}]
  %11 = xla_tuple %s9, %s10
  %s12 = sld [smem:[#allocation0]]
  $region74: #{tpu_custom_call.1} parent=0
    _
  %s14 = ssub.s32 1, %s12
  %s15 = scalar_select 0, %s14, %s12
  $region1: #{tpu_custom_call.1} parent=0
    #allocation3 [shape = 'u8[8192]{0}', space=vmem, size = 0x2000, scoped, tag = 'input window, operand 1, single buffered']
    #allocation4 [shape = 's32[1]{0}', space=sflag, size = 0x4, scoped, tag = 'scoped memory for tpu_custom_call.1']
    #allocation5 [shape = 's32[1]{0}', space=sflag, size = 0x4, scoped, tag = 'scoped memory for tpu_custom_call.1']
    #allocation6 [shape = 'u8[65536]{0}', space=vmem, size = 0x10000, scoped, tag = 'input window, operand 2, single buffered']
    #allocation7 [shape = 's32[1]{0}', space=sflag, size = 0x4, scoped, tag = 'scoped memory for tpu_custom_call.1']
    #allocation8 [shape = 'u8[32768]{0}', space=vmem, size = 0x8000, scoped, tag = 'input window, operand 3, single buffered']
    #allocation9 [shape = 'u8[512]{0}', space=vmem, size = 0x400, scoped, tag = 'input window, operand 4, single buffered']
    #allocation10 [shape = 's32[1]{0}', space=sflag, size = 0x4, scoped, tag = 'scoped memory for tpu_custom_call.1']
    #allocation11 [shape = 'u8[32768]{0}', space=vmem, size = 0x8000, scoped, tag = 'input window, operand 5, single buffered']
    #allocation12 [shape = 'u8[1024]{0}', space=vmem, size = 0x400, scoped, tag = 'output window, operand 0, single buffered']
    #allocation13 [shape = 'u8[1024]{0}', space=vmem, size = 0x400, scoped, tag = 'output window, operand 1, single buffered']
    #allocation14 [shape = 's32[1]{0}', space=sflag, size = 0x4, scoped, tag = 'scoped memory for tpu_custom_call.1']
    %16 = vsyncpa [#allocation4], 0
    %17 = vsyncpa [#allocation7], 0
    %18 = vsyncpa [#allocation10], 0
    %19 = vsyncpa [#allocation5], 0
    %20 = vsyncpa [#allocation14], 0
    // Predicated region
    $region2: #{tpu_custom_call.1} parent=1 // pred_check
      _
    $region3: #{tpu_custom_call.1} parent=1 // pred_check_branch
      %22 = sbr.rel (0) target = $region5
    $region4: #{tpu_custom_call.1} parent=1 // pred_region
      _
    $region5: #{tpu_custom_call.1} parent=1 // pred_fallthru
      _
    // Predicated region
    $region6: #{tpu_custom_call.1} parent=1 // pred_check
      _
    $region7: #{tpu_custom_call.1} parent=1 // pred_check_branch
      %24 = sbr.rel (0) target = $region9
    $region8: #{tpu_custom_call.1} parent=1 // pred_region
      %s26 = ssub.s32 256, 256
      %27 = vsyncadd [#allocation4], %s26
      %s28 = sshll.u32 [#allocation3], 4
      %s29 = int_to_ptr.vmem [resolvable:$true] %s28
      %34 = dma.hbm_to_vmem [thread:$0]  %s1, 256, %s29, [#allocation4], 128, 128, 8
    $region9: #{tpu_custom_call.1} parent=1 // pred_fallthru
      _
    // Predicated region
    $region10: #{tpu_custom_call.1} parent=1 // pred_check
      _
    $region11: #{tpu_custom_call.1} parent=1 // pred_check_branch
      %36 = sbr.rel (0) target = $region13
    $region12: #{tpu_custom_call.1} parent=1 // pred_region
      %s38 = ssub.s32 2048, 2048
      %39 = vsyncadd [#allocation7], %s38
      %s40 = sshll.u32 [#allocation6], 4
      %s41 = int_to_ptr.vmem [resolvable:$true] %s40
      %46 = dma.hbm_to_vmem [thread:$0]  %s2, 2048, %s41, [#allocation7], 256, 256, 16
    $region13: #{tpu_custom_call.1} parent=1 // pred_fallthru
      _
    // Predicated region
    $region14: #{tpu_custom_call.1} parent=1 // pred_check
      _
    $region15: #{tpu_custom_call.1} parent=1 // pred_check_branch
      %48 = sbr.rel (0) target = $region17
    $region16: #{tpu_custom_call.1} parent=1 // pred_region
      %s50 = ssub.s32 1024, 1024
      %51 = vsyncadd [#allocation7], %s50
      %s52 = sshll.u32 [#allocation8], 4
      %s53 = int_to_ptr.vmem [resolvable:$true] %s52
      %58 = dma.hbm_to_vmem [thread:$0]  %s3, 1024, %s53, [#allocation7], 128, 128, 8
    $region17: #{tpu_custom_call.1} parent=1 // pred_fallthru
      _
    // Predicated region
    $region18: #{tpu_custom_call.1} parent=1 // pred_check
      _
    $region19: #{tpu_custom_call.1} parent=1 // pred_check_branch
      %60 = sbr.rel (0) target = $region21
    $region20: #{tpu_custom_call.1} parent=1 // pred_region
      %s62 = ssub.s32 16, 16
      %63 = vsyncadd [#allocation10], %s62
      %s65 = sshll.u32 [#allocation9], 4
      %s66 = int_to_ptr.vmem [resolvable:$true] %s65
      %68 = dma.hbm_to_vmem [thread:$0]  %s4, 16, %s66, [#allocation10]
    $region21: #{tpu_custom_call.1} parent=1 // pred_fallthru
      _
    // Predicated region
    $region22: #{tpu_custom_call.1} parent=1 // pred_check
      _
    $region23: #{tpu_custom_call.1} parent=1 // pred_check_branch
      %70 = sbr.rel (0) target = $region25
    $region24: #{tpu_custom_call.1} parent=1 // pred_region
      %s72 = ssub.s32 1024, 1024
      %73 = vsyncadd [#allocation10], %s72
      %s74 = sshll.u32 [#allocation11], 4
      %s75 = int_to_ptr.vmem [resolvable:$true] %s74
      %80 = dma.hbm_to_vmem [thread:$0]  %s5, 1024, %s75, [#allocation10], 128, 128, 8
    $region25: #{tpu_custom_call.1} parent=1 // pred_fallthru
      _
    // Predicated region
    $region26: #{tpu_custom_call.1} parent=1 // pred_check
      _
    $region27: #{tpu_custom_call.1} parent=1 // pred_check_branch
      %82 = sbr.rel (0) target = $region29
    $region28: #{tpu_custom_call.1} parent=1 // pred_region
      _
    $region29: #{tpu_custom_call.1} parent=1 // pred_fallthru
      _
    // Predicated region
    $region30: #{tpu_custom_call.1} parent=1 // pred_check
      _
    $region31: #{tpu_custom_call.1} parent=1 // pred_check_branch
      %84 = sbr.rel (0) target = $region33
    $region32: #{tpu_custom_call.1} parent=1 // pred_region
      _
    $region33: #{tpu_custom_call.1} parent=1 // pred_fallthru
      _
    // Predicated region
    $region34: #{tpu_custom_call.1} parent=1 // pred_check
      _
    $region35: #{tpu_custom_call.1} parent=1 // pred_check_branch
      %86 = sbr.rel (0) target = $region37
    $region36: #{tpu_custom_call.1} parent=1 // pred_region
      _
    $region37: #{tpu_custom_call.1} parent=1 // pred_fallthru
      _
    // Predicated region
    $region38: #{tpu_custom_call.1} parent=1 // pred_check
      _
    $region39: #{tpu_custom_call.1} parent=1 // pred_check_branch
      %88 = sbr.rel (0) target = $region41
    $region40: #{tpu_custom_call.1} parent=1 // pred_region
      %89 = dma.done [#allocation4], 256
    $region41: #{tpu_custom_call.1} parent=1 // pred_fallthru
      _
    // Predicated region
    $region42: #{tpu_custom_call.1} parent=1 // pred_check
      _
    $region43: #{tpu_custom_call.1} parent=1 // pred_check_branch
      %91 = sbr.rel (0) target = $region45
    $region44: #{tpu_custom_call.1} parent=1 // pred_region
      %92 = dma.done [#allocation7], 2048
    $region45: #{tpu_custom_call.1} parent=1 // pred_fallthru
      _
    // Predicated region
    $region46: #{tpu_custom_call.1} parent=1 // pred_check
      _
    $region47: #{tpu_custom_call.1} parent=1 // pred_check_branch
      %94 = sbr.rel (0) target = $region49
    $region48: #{tpu_custom_call.1} parent=1 // pred_region
      %95 = dma.done [#allocation7], 1024
    $region49: #{tpu_custom_call.1} parent=1 // pred_fallthru
      _
    // Predicated region
    $region50: #{tpu_custom_call.1} parent=1 // pred_check
      _
    $region51: #{tpu_custom_call.1} parent=1 // pred_check_branch
      %97 = sbr.rel (0) target = $region53
    $region52: #{tpu_custom_call.1} parent=1 // pred_region
      %98 = dma.done [#allocation10], 16
    $region53: #{tpu_custom_call.1} parent=1 // pred_fallthru
      _
    // Predicated region
    $region54: #{tpu_custom_call.1} parent=1 // pred_check
      _
    $region55: #{tpu_custom_call.1} parent=1 // pred_check_branch
      %100 = sbr.rel (0) target = $region57
    $region56: #{tpu_custom_call.1} parent=1 // pred_region
      %101 = dma.done [#allocation10], 1024
    $region57: #{tpu_custom_call.1} parent=1 // pred_fallthru
      _
    %v102 = vld [vmem:[%s0] sm:$0xff]
    %v103 = vld [vmem:[%s0 + $0x8] sm:$0xff]
    %v104 = vld [vmem:[#allocation8] sm:$0xff]
    %v105 = vld [vmem:[#allocation8 + $0x8] sm:$0xff]
    %v106 = vld [vmem:[#allocation8 + $0x10] sm:$0xff]
    %v107 = vld [vmem:[#allocation8 + $0x18] sm:$0xff]
    %v108 = vld [vmem:[#allocation8 + $0x20] sm:$0xff]
    %v109 = vld [vmem:[#allocation8 + $0x28] sm:$0xff]
    %v110 = vld [vmem:[#allocation8 + $0x30] sm:$0xff]
    %v111 = vld [vmem:[#allocation8 + $0x38] sm:$0xff]
    %v112 = vld [vmem:[#allocation9] sm:$0x1]
    %v114 = vlaneseq
    %v115 = vshrl.u32 %v114, 7
    %v116 = vsub.s32 0, %v115
    %v117 = vrot.slane %v112, %v116
    %vm119 = vcmask 523264
    %v121 = vsel %vm119, %v102, 0
    %v124 = vsel %vm119, %v103, 0
    %126 = vmatprep.subr.mxu0 0.0
    %127 = vmatpush1.msra.mxu0 %v104
    %128 = vmatprep.subr.mxu0 0.0
    %129 = vmatpush1.msra.mxu0 %v105
    %130 = vmatprep.subr.mxu0 0.0
    %131 = vmatpush1.msra.mxu0 %v106
    %132 = vmatprep.subr.mxu0 0.0
    %133 = vmatpush1.msra.mxu0 %v107
    %134 = vmatprep.subr.mxu0 0.0
    %135 = vmatpush1.msra.mxu0 %v108
    %136 = vmatprep.subr.mxu0 0.0
    %137 = vmatpush1.msra.mxu0 %v109
    %138 = vmatprep.subr.mxu0 0.0
    %139 = vmatpush1.msra.mxu0 %v110
    %140 = vmatprep.subr.mxu0 0.0
    %141 = vmatpush1.msra.mxu0 %v111
    %142 = vmatprep.subr.mxu0 0.0
    %143 = vmatpush1.msra.mxu0 0.0
    %144 = vmatprep.subr.mxu0 0.0
    %145 = vmatpush1.msra.mxu0 0.0
    %146 = vmatprep.subr.mxu0 0.0
    %147 = vmatpush1.msra.mxu0 0.0
    %148 = vmatprep.subr.mxu0 0.0
    %149 = vmatpush1.msra.mxu0 0.0
    %150 = vmatprep.subr.mxu0 0.0
    %151 = vmatpush1.msra.mxu0 0.0
    %152 = vmatprep.subr.mxu0 0.0
    %153 = vmatpush1.msra.mxu0 0.0
    %154 = vmatprep.subr.mxu0 0.0
    %155 = vmatpush1.msra.mxu0 0.0
    %156 = vmatprep.subr.mxu0 0.0
    %157 = vmatpush1.msra.mxu0 0.0
    %158 = vmatprep.subr.mxu0 0.0
    %159 = vmatpush1.msra.mxu0 0.0
    %160 = vmatprep.subr.mxu0 0.0
    %161 = vmatpush1.msra.mxu0 0.0
    %162 = vmatprep.subr.mxu0 0.0
    %163 = vmatpush1.msra.mxu0 0.0
    %164 = vmatprep.subr.mxu0 0.0
    %165 = vmatpush1.msra.mxu0 0.0
    %166 = vmatprep.subr.mxu0 0.0
    %167 = vmatpush1.msra.mxu0 0.0
    %168 = vmatprep.subr.mxu0 0.0
    %169 = vmatpush1.msra.mxu0 0.0
    %170 = vmatprep.subr.mxu0 0.0
    %171 = vmatpush1.msra.mxu0 0.0
    %172 = vmatprep.subr.mxu0 0.0
    %173 = vmatpush1.msra.mxu0 0.0
    %174 = vmatprep.subr.mxu0 0.0
    %175 = vmatpush1.msra.mxu0 0.0
    %176 = vmatprep.subr.mxu0 0.0
    %177 = vmatpush1.msra.mxu0 0.0
    %178 = vmatprep.subr.mxu0 0.0
    %179 = vmatpush1.msra.mxu0 0.0
    %180 = vmatprep.subr.mxu0 0.0
    %181 = vmatpush1.msra.mxu0 0.0
    %182 = vmatprep.subr.mxu0 0.0
    %183 = vmatpush1.msra.mxu0 0.0
    %184 = vmatprep.subr.mxu0 0.0
    %185 = vmatpush1.msra.mxu0 0.0
    %186 = vmatprep.subr.mxu0 0.0
    %187 = vmatpush1.msra.mxu0 0.0
    %188 = vmatprep.subr.mxu0 0.0
    %189 = vmatpush1.msra.mxu0 0.0
    %190 = vmatprep.mubr.f32.mxu0 0.0
    %191 = vmatmul.mubr.f32.gmra.mrb[0].mxu0 %v121
    %v192 = vpop.f32.mrb[0].mxu0
    %v193 = vadd.f32 %v117, %v192
    %v194 = vpop.f32.mrb[0].mxu0
    %195 = vmatprep.mubr.f32.mxu0 0.0
    %196 = vmatmul.mubr.f32.gmra.mrb[0].mxu0 %v124
    %v197 = vpop.f32.mrb[0].mxu0
    %v198 = vadd.f32 %v117, %v197
    %v199 = vpop.f32.mrb[0].mxu0
    %200 = vdwg.mxu0
    %v201 = vld [vmem:[#allocation3] sm:$0xff]
    %v202 = vld [vmem:[#allocation3 + $0x8] sm:$0xff]
    %v203 = vld [vmem:[#allocation11] sm:$0xff]
    %v204 = vld [vmem:[#allocation11 + $0x8] sm:$0xff]
    %v205 = vld [vmem:[#allocation11 + $0x10] sm:$0xff]
    %v206 = vld [vmem:[#allocation11 + $0x18] sm:$0xff]
    %v207 = vld [vmem:[#allocation11 + $0x20] sm:$0xff]
    %v208 = vld [vmem:[#allocation11 + $0x28] sm:$0xff]
    %v209 = vld [vmem:[#allocation11 + $0x30] sm:$0xff]
    %v210 = vld [vmem:[#allocation11 + $0x38] sm:$0xff]
    %v211 = vld [vmem:[%s6] sm:$0x1]
    %v213 = vlaneseq
    %v214 = vshrl.u32 %v213, 7
    %v215 = vsub.s32 0, %v214
    %v216 = vrot.slane %v211, %v215
    %v219 = vsel %vm119, %v201, 0
    %v222 = vsel %vm119, %v202, 0
    %224 = vmatprep.subr.mxu0 0.0
    %225 = vmatpush1.msra.mxu0 %v203
    %226 = vmatprep.subr.mxu0 0.0
    %227 = vmatpush1.msra.mxu0 %v204
    %228 = vmatprep.subr.mxu0 0.0
    %229 = vmatpush1.msra.mxu0 %v205
    %230 = vmatprep.subr.mxu0 0.0
    %231 = vmatpush1.msra.mxu0 %v206
    %232 = vmatprep.subr.mxu0 0.0
    %233 = vmatpush1.msra.mxu0 %v207
    %234 = vmatprep.subr.mxu0 0.0
    %235 = vmatpush1.msra.mxu0 %v208
    %236 = vmatprep.subr.mxu0 0.0
    %237 = vmatpush1.msra.mxu0 %v209
    %238 = vmatprep.subr.mxu0 0.0
    %239 = vmatpush1.msra.mxu0 %v210
    %240 = vmatprep.subr.mxu0 0.0
    %241 = vmatpush1.msra.mxu0 0.0
    %242 = vmatprep.subr.mxu0 0.0
    %243 = vmatpush1.msra.mxu0 0.0
    %244 = vmatprep.subr.mxu0 0.0
    %245 = vmatpush1.msra.mxu0 0.0
    %246 = vmatprep.subr.mxu0 0.0
    %247 = vmatpush1.msra.mxu0 0.0
    %248 = vmatprep.subr.mxu0 0.0
    %249 = vmatpush1.msra.mxu0 0.0
    %250 = vmatprep.subr.mxu0 0.0
    %251 = vmatpush1.msra.mxu0 0.0
    %252 = vmatprep.subr.mxu0 0.0
    %253 = vmatpush1.msra.mxu0 0.0
    %254 = vmatprep.subr.mxu0 0.0
    %255 = vmatpush1.msra.mxu0 0.0
    %256 = vmatprep.subr.mxu0 0.0
    %257 = vmatpush1.msra.mxu0 0.0
    %258 = vmatprep.subr.mxu0 0.0
    %259 = vmatpush1.msra.mxu0 0.0
    %260 = vmatprep.subr.mxu0 0.0
    %261 = vmatpush1.msra.mxu0 0.0
    %262 = vmatprep.subr.mxu0 0.0
    %263 = vmatpush1.msra.mxu0 0.0
    %264 = vmatprep.subr.mxu0 0.0
    %265 = vmatpush1.msra.mxu0 0.0
    %266 = vmatprep.subr.mxu0 0.0
    %267 = vmatpush1.msra.mxu0 0.0
    %268 = vmatprep.subr.mxu0 0.0
    %269 = vmatpush1.msra.mxu0 0.0
    %270 = vmatprep.subr.mxu0 0.0
    %271 = vmatpush1.msra.mxu0 0.0
    %272 = vmatprep.subr.mxu0 0.0
    %273 = vmatpush1.msra.mxu0 0.0
    %274 = vmatprep.subr.mxu0 0.0
    %275 = vmatpush1.msra.mxu0 0.0
    %276 = vmatprep.subr.mxu0 0.0
    %277 = vmatpush1.msra.mxu0 0.0
    %278 = vmatprep.subr.mxu0 0.0
    %279 = vmatpush1.msra.mxu0 0.0
    %280 = vmatprep.subr.mxu0 0.0
    %281 = vmatpush1.msra.mxu0 0.0
    %282 = vmatprep.subr.mxu0 0.0
    %283 = vmatpush1.msra.mxu0 0.0
    %284 = vmatprep.subr.mxu0 0.0
    %285 = vmatpush1.msra.mxu0 0.0
    %286 = vmatprep.subr.mxu0 0.0
    %287 = vmatpush1.msra.mxu0 0.0
    %288 = vmatprep.mubr.f32.mxu0 0.0
    %289 = vmatmul.mubr.f32.gmra.mrb[0].mxu0 %v219
    %v290 = vpop.f32.mrb[0].mxu0
    %v291 = vadd.f32 %v216, %v290
    %v292 = vpop.f32.mrb[0].mxu0
    %293 = vmatprep.mubr.f32.mxu0 0.0
    %294 = vmatmul.mubr.f32.gmra.mrb[0].mxu0 %v222
    %v295 = vpop.f32.mrb[0].mxu0
    %v296 = vadd.f32 %v216, %v295
    %v297 = vpop.f32.mrb[0].mxu0
    %298 = vdwg.mxu0
    %v300 = vsel %vm119, %v193, 0
    %v303 = vsel %vm119, %v198, 0
    %v306 = vsel %vm119, %v291, 0
    %v309 = vsel %vm119, %v296, 0
    %311 = vmatprep.subr.mxu0 0.0
    %312 = vmatpush1.xpose.msra.mxu0 %v306
    %313 = vmatprep.subr.mxu0 0.0
    %314 = vmatpush1.xpose.msra.mxu0 %v309
    %315 = vmatprep.subr.mxu0 0.0
    %316 = vmatpush1.xpose.msra.mxu0 0.0
    %317 = vmatprep.subr.mxu0 0.0
    %318 = vmatpush1.xpose.msra.mxu0 0.0
    %319 = vmatprep.subr.mxu0 0.0
    %320 = vmatpush1.xpose.msra.mxu0 0.0
    %321 = vmatprep.subr.mxu0 0.0
    %322 = vmatpush1.xpose.msra.mxu0 0.0
    %323 = vmatprep.subr.mxu0 0.0
    %324 = vmatpush1.xpose.msra.mxu0 0.0
    %325 = vmatprep.subr.mxu0 0.0
    %326 = vmatpush1.xpose.msra.mxu0 0.0
    %327 = vmatprep.subr.mxu0 0.0
    %328 = vmatpush1.xpose.msra.mxu0 0.0
    %329 = vmatprep.subr.mxu0 0.0
    %330 = vmatpush1.xpose.msra.mxu0 0.0
    %331 = vmatprep.subr.mxu0 0.0
    %332 = vmatpush1.xpose.msra.mxu0 0.0
    %333 = vmatprep.subr.mxu0 0.0
    %334 = vmatpush1.xpose.msra.mxu0 0.0
    %335 = vmatprep.subr.mxu0 0.0
    %336 = vmatpush1.xpose.msra.mxu0 0.0
    %337 = vmatprep.subr.mxu0 0.0
    %338 = vmatpush1.xpose.msra.mxu0 0.0
    %339 = vmatprep.subr.mxu0 0.0
    %340 = vmatpush1.xpose.msra.mxu0 0.0
    %341 = vmatprep.subr.mxu0 0.0
    %342 = vmatpush1.xpose.msra.mxu0 0.0
    %343 = vmatprep.subr.mxu0 0.0
    %344 = vmatpush1.xpose.msra.mxu0 0.0
    %345 = vmatprep.subr.mxu0 0.0
    %346 = vmatpush1.xpose.msra.mxu0 0.0
    %347 = vmatprep.subr.mxu0 0.0
    %348 = vmatpush1.xpose.msra.mxu0 0.0
    %349 = vmatprep.subr.mxu0 0.0
    %350 = vmatpush1.xpose.msra.mxu0 0.0
    %351 = vmatprep.subr.mxu0 0.0
    %352 = vmatpush1.xpose.msra.mxu0 0.0
    %353 = vmatprep.subr.mxu0 0.0
    %354 = vmatpush1.xpose.msra.mxu0 0.0
    %355 = vmatprep.subr.mxu0 0.0
    %356 = vmatpush1.xpose.msra.mxu0 0.0
    %357 = vmatprep.subr.mxu0 0.0
    %358 = vmatpush1.xpose.msra.mxu0 0.0
    %359 = vmatprep.subr.mxu0 0.0
    %360 = vmatpush1.xpose.msra.mxu0 0.0
    %361 = vmatprep.subr.mxu0 0.0
    %362 = vmatpush1.xpose.msra.mxu0 0.0
    %363 = vmatprep.subr.mxu0 0.0
    %364 = vmatpush1.xpose.msra.mxu0 0.0
    %365 = vmatprep.subr.mxu0 0.0
    %366 = vmatpush1.xpose.msra.mxu0 0.0
    %367 = vmatprep.subr.mxu0 0.0
    %368 = vmatpush1.xpose.msra.mxu0 0.0
    %369 = vmatprep.subr.mxu0 0.0
    %370 = vmatpush1.xpose.msra.mxu0 0.0
    %371 = vmatprep.subr.mxu0 0.0
    %372 = vmatpush1.xpose.msra.mxu0 0.0
    %373 = vmatprep.subr.mxu0 0.0
    %374 = vmatpush1.xpose.msra.mxu0 0.0
    %375 = vmatprep.mubr.f32.mxu0 0.0
    %376 = vmatmul.mubr.f32.gmra.mrb[0].mxu0 %v300
    %v377 = vpop.f32.mrb[0].mxu0
    %v378 = vadd.f32 0.0, %v377
    %v379 = vpop.f32.mrb[0].mxu0
    %380 = vmatprep.mubr.f32.mxu0 0.0
    %381 = vmatmul.mubr.f32.gmra.mrb[0].mxu0 %v303
    %v382 = vpop.f32.mrb[0].mxu0
    %v383 = vadd.f32 0.0, %v382
    %v384 = vpop.f32.mrb[0].mxu0
    %385 = vdwg.mxu0
    %v386 = vmul.f32 %v378, 0.125
    %v387 = vmul.f32 %v383, 0.125
    %v388 = vlaneseq
    %vm389 = vcmp.ge.s32.totalorder %v388, 0
    %vm390 = vcmp.lt.s32.totalorder %v388, 16
    %vm391 = vmand %vm389, %vm390
    %392 = vst.msk [vmem:[#allocation2] sm:$0x1] %vm391, %v386
    %v395 = vunpack.c.l.s4 1966171168
    %v396 = vunpack.c.0.s8 %v395
    %v397 = vlaneseq
    %v398 = vshrl.u32 %v397, 7
    %v399 = vsub.s32 %v396, %v398
    %v400 = vrot.slane %v386, %v399
    %v401 = vcombine.high %v400, %v400
    %v403 = vunpack.c.l.s4 1966171168
    %v404 = vunpack.c.0.s8 %v403
    %v405 = vlaneseq
    %v406 = vshrl.u32 %v405, 7
    %v407 = vsub.s32 %v404, %v406
    %v408 = vrot.slane %v400, %v407
    %v410 = vunpack.c.l.s4 1966171168
    %v411 = vunpack.c.0.s8 %v410
    %v412 = vlaneseq
    %v413 = vshrl.u32 %v412, 7
    %v414 = vsub.s32 %v411, %v413
    %v415 = vrot.slane %v401, %v414
    %416 = vrot.lane.b32.xlu0 %v415, 16
    %v417 = vpop.permute.xlu0 %416
    %vm419 = vcmp.ge.s32.totalorder %v388, 16
    %vm420 = vcmp.lt.s32.totalorder %v388, 32
    %vm421 = vmand %vm419, %vm420
    %422 = vst.msk [vmem:[#allocation2] sm:$0x1] %vm421, %v417
    %v423 = vcombine.high %v408, %v408
    %424 = vrot.lane.b32.xlu0 %v423, 32
    %v425 = vpop.permute.xlu0 %424
    %vm427 = vcmp.ge.s32.totalorder %v388, 32
    %vm428 = vcmp.lt.s32.totalorder %v388, 48
    %vm429 = vmand %vm427, %vm428
    %430 = vst.msk [vmem:[#allocation2] sm:$0x1] %vm429, %v425
    %v431 = vcombine.high %v415, %v415
    %432 = vrot.lane.b32.xlu0 %v431, 48
    %v433 = vpop.permute.xlu0 %432
    %vm435 = vcmp.ge.s32.totalorder %v388, 48
    %vm436 = vcmp.lt.s32.totalorder %v388, 64
    %vm437 = vmand %vm435, %vm436
    %438 = vst.msk [vmem:[#allocation2] sm:$0x1] %vm437, %v433
    %v439 = vcombine.high %v386, %v386
    %v441 = vunpack.c.l.s4 1966171168
    %v442 = vunpack.c.0.s8 %v441
    %v443 = vlaneseq
    %v444 = vshrl.u32 %v443, 7
    %v445 = vsub.s32 %v442, %v444
    %v446 = vrot.slane %v439, %v445
    %v448 = vunpack.c.l.s4 1966171168
    %v449 = vunpack.c.0.s8 %v448
    %v450 = vlaneseq
    %v451 = vshrl.u32 %v450, 7
    %v452 = vsub.s32 %v449, %v451
    %v453 = vrot.slane %v446, %v452
    %454 = vrot.lane.b32.xlu0 %v453, 64
    %v455 = vpop.permute.xlu0 %454
    %vm457 = vcmp.ge.s32.totalorder %v388, 64
    %vm458 = vcmp.lt.s32.totalorder %v388, 80
    %vm459 = vmand %vm457, %vm458
    %460 = vst.msk [vmem:[#allocation2] sm:$0x1] %vm459, %v455
    %v461 = vcombine.high %v446, %v446
    %v463 = vunpack.c.l.s4 1966171168
    %v464 = vunpack.c.0.s8 %v463
    %v465 = vlaneseq
    %v466 = vshrl.u32 %v465, 7
    %v467 = vsub.s32 %v464, %v466
    %v468 = vrot.slane %v461, %v467
    %469 = vrot.lane.b32.xlu0 %v468, 80
    %v470 = vpop.permute.xlu0 %469
    %vm472 = vcmp.ge.s32.totalorder %v388, 80
    %vm473 = vcmp.lt.s32.totalorder %v388, 96
    %vm474 = vmand %vm472, %vm473
    %475 = vst.msk [vmem:[#allocation2] sm:$0x1] %vm474, %v470
    %v476 = vcombine.high %v453, %v453
    %477 = vrot.lane.b32.xlu0 %v476, 96
    %v478 = vpop.permute.xlu0 %477
    %vm480 = vcmp.ge.s32.totalorder %v388, 96
    %vm481 = vcmp.lt.s32.totalorder %v388, 112
    %vm482 = vmand %vm480, %vm481
    %483 = vst.msk [vmem:[#allocation2] sm:$0x1] %vm482, %v478
    %v484 = vcombine.high %v468, %v468
    %485 = vrot.lane.b32.xlu0 %v484, 112
    %v486 = vpop.permute.xlu0 %485
    %vm488 = vcmp.ge.s32.totalorder %v388, 112
    %vm489 = vcmp.lt.s32.totalorder %v388, 128
    %vm490 = vmand %vm488, %vm489
    %491 = vst.msk [vmem:[#allocation2] sm:$0x1] %vm490, %v486
    %492 = vst.msk [vmem:[#allocation2 + $0x1] sm:$0x1] %vm391, %v387
    %v495 = vunpack.c.l.s4 1966171168
    %v496 = vunpack.c.0.s8 %v495
    %v497 = vlaneseq
    %v498 = vshrl.u32 %v497, 7
    %v499 = vsub.s32 %v496, %v498
    %v500 = vrot.slane %v387, %v499
    %v501 = vcombine.high %v500, %v500
    %v503 = vunpack.c.l.s4 1966171168
    %v504 = vunpack.c.0.s8 %v503
    %v505 = vlaneseq
    %v506 = vshrl.u32 %v505, 7
    %v507 = vsub.s32 %v504, %v506
    %v508 = vrot.slane %v500, %v507
    %v510 = vunpack.c.l.s4 1966171168
    %v511 = vunpack.c.0.s8 %v510
    %v512 = vlaneseq
    %v513 = vshrl.u32 %v512, 7
    %v514 = vsub.s32 %v511, %v513
    %v515 = vrot.slane %v501, %v514
    %516 = vrot.lane.b32.xlu0 %v515, 16
    %v517 = vpop.permute.xlu0 %516
    %519 = vst.msk [vmem:[#allocation2 + $0x1] sm:$0x1] %vm421, %v517
    %v520 = vcombine.high %v508, %v508
    %521 = vrot.lane.b32.xlu0 %v520, 32
    %v522 = vpop.permute.xlu0 %521
    %524 = vst.msk [vmem:[#allocation2 + $0x1] sm:$0x1] %vm429, %v522
    %v525 = vcombine.high %v515, %v515
    %526 = vrot.lane.b32.xlu0 %v525, 48
    %v527 = vpop.permute.xlu0 %526
    %529 = vst.msk [vmem:[#allocation2 + $0x1] sm:$0x1] %vm437, %v527
    %v530 = vcombine.high %v387, %v387
    %v532 = vunpack.c.l.s4 1966171168
    %v533 = vunpack.c.0.s8 %v532
    %v534 = vlaneseq
    %v535 = vshrl.u32 %v534, 7
    %v536 = vsub.s32 %v533, %v535
    %v537 = vrot.slane %v530, %v536
    %v539 = vunpack.c.l.s4 1966171168
    %v540 = vunpack.c.0.s8 %v539
    %v541 = vlaneseq
    %v542 = vshrl.u32 %v541, 7
    %v543 = vsub.s32 %v540, %v542
    %v544 = vrot.slane %v537, %v543
    %545 = vrot.lane.b32.xlu0 %v544, 64
    %v546 = vpop.permute.xlu0 %545
    %548 = vst.msk [vmem:[#allocation2 + $0x1] sm:$0x1] %vm459, %v546
    %v549 = vcombine.high %v537, %v537
    %v551 = vunpack.c.l.s4 1966171168
    %v552 = vunpack.c.0.s8 %v551
    %v553 = vlaneseq
    %v554 = vshrl.u32 %v553, 7
    %v555 = vsub.s32 %v552, %v554
    %v556 = vrot.slane %v549, %v555
    %557 = vrot.lane.b32.xlu0 %v556, 80
    %v558 = vpop.permute.xlu0 %557
    %560 = vst.msk [vmem:[#allocation2 + $0x1] sm:$0x1] %vm474, %v558
    %v561 = vcombine.high %v544, %v544
    %562 = vrot.lane.b32.xlu0 %v561, 96
    %v563 = vpop.permute.xlu0 %562
    %565 = vst.msk [vmem:[#allocation2 + $0x1] sm:$0x1] %vm482, %v563
    %v566 = vcombine.high %v556, %v556
    %567 = vrot.lane.b32.xlu0 %v566, 112
    %v568 = vpop.permute.xlu0 %567
    %570 = vst.msk [vmem:[#allocation2 + $0x1] sm:$0x1] %vm490, %v568
    %v571 = vld [vmem:[#allocation2] sm:$0x3]
    %v572 = vsub.f32 0.0, %v571
    %v573 = vmul.f32 %v572, 1.442695
    %v574 = vpow.pop %v573
    %v575 = vld [vmem:[%s7] sm:$0xff]
    %v576 = vld [vmem:[%s7 + $0x8] sm:$0xff]
    %v577 = vld [vmem:[#allocation6] sm:$0xff]
    %v578 = vld [vmem:[#allocation6 + $0x8] sm:$0xff]
    %v579 = vld [vmem:[#allocation6 + $0x10] sm:$0xff]
    %v580 = vld [vmem:[#allocation6 + $0x18] sm:$0xff]
    %v581 = vld [vmem:[#allocation6 + $0x20] sm:$0xff]
    %v582 = vld [vmem:[#allocation6 + $0x28] sm:$0xff]
    %v583 = vld [vmem:[#allocation6 + $0x30] sm:$0xff]
    %v584 = vld [vmem:[#allocation6 + $0x38] sm:$0xff]
    %v585 = vld [vmem:[#allocation6 + $0x40] sm:$0xff]
    %v586 = vld [vmem:[#allocation6 + $0x48] sm:$0xff]
    %v587 = vld [vmem:[#allocation6 + $0x50] sm:$0xff]
    %v588 = vld [vmem:[#allocation6 + $0x58] sm:$0xff]
    %v589 = vld [vmem:[#allocation6 + $0x60] sm:$0xff]
    %v590 = vld [vmem:[#allocation6 + $0x68] sm:$0xff]
    %v591 = vld [vmem:[#allocation6 + $0x70] sm:$0xff]
    %v592 = vld [vmem:[#allocation6 + $0x78] sm:$0xff]
    %v593 = vld [vmem:[%s8] sm:$0xff]
    %v594 = vld [vmem:[%s8 + $0x8] sm:$0xff]
    %596 = vset.pattern.permute.xlu0 0
    %597 = vperm.xlu0 %596, %v593
    %v598 = vpop.permute.xlu0 %597
    %601 = vset.pattern.permute.xlu0 0
    %602 = vperm.xlu0 %601, %v594
    %v603 = vpop.permute.xlu0 %602
    %v606 = vsel %vm119, %v575, 0
    %v609 = vsel %vm119, %v576, 0
    %611 = vmatprep.subr.mxu0 %v578
    %612 = vmatpush1.msra.mxu0 %v577
    %613 = vmatprep.subr.mxu0 %v580
    %614 = vmatpush1.msra.mxu0 %v579
    %615 = vmatprep.subr.mxu0 %v582
    %616 = vmatpush1.msra.mxu0 %v581
    %617 = vmatprep.subr.mxu0 %v584
    %618 = vmatpush1.msra.mxu0 %v583
    %619 = vmatprep.subr.mxu0 %v586
    %620 = vmatpush1.msra.mxu0 %v585
    %621 = vmatprep.subr.mxu0 %v588
    %622 = vmatpush1.msra.mxu0 %v587
    %623 = vmatprep.subr.mxu0 %v590
    %624 = vmatpush1.msra.mxu0 %v589
    %625 = vmatprep.subr.mxu0 %v592
    %626 = vmatpush1.msra.mxu0 %v591
    %627 = vmatprep.subr.mxu0 0.0
    %628 = vmatpush1.msra.mxu0 0.0
    %629 = vmatprep.subr.mxu0 0.0
    %630 = vmatpush1.msra.mxu0 0.0
    %631 = vmatprep.subr.mxu0 0.0
    %632 = vmatpush1.msra.mxu0 0.0
    %633 = vmatprep.subr.mxu0 0.0
    %634 = vmatpush1.msra.mxu0 0.0
    %635 = vmatprep.subr.mxu0 0.0
    %636 = vmatpush1.msra.mxu0 0.0
    %637 = vmatprep.subr.mxu0 0.0
    %638 = vmatpush1.msra.mxu0 0.0
    %639 = vmatprep.subr.mxu0 0.0
    %640 = vmatpush1.msra.mxu0 0.0
    %641 = vmatprep.subr.mxu0 0.0
    %642 = vmatpush1.msra.mxu0 0.0
    %643 = vmatprep.subr.mxu0 0.0
    %644 = vmatpush1.msra.mxu0 0.0
    %645 = vmatprep.subr.mxu0 0.0
    %646 = vmatpush1.msra.mxu0 0.0
    %647 = vmatprep.subr.mxu0 0.0
    %648 = vmatpush1.msra.mxu0 0.0
    %649 = vmatprep.subr.mxu0 0.0
    %650 = vmatpush1.msra.mxu0 0.0
    %651 = vmatprep.subr.mxu0 0.0
    %652 = vmatpush1.msra.mxu0 0.0
    %653 = vmatprep.subr.mxu0 0.0
    %654 = vmatpush1.msra.mxu0 0.0
    %655 = vmatprep.subr.mxu0 0.0
    %656 = vmatpush1.msra.mxu0 0.0
    %657 = vmatprep.subr.mxu0 0.0
    %658 = vmatpush1.msra.mxu0 0.0
    %659 = vmatprep.subr.mxu0 0.0
    %660 = vmatpush1.msra.mxu0 0.0
    %661 = vmatprep.subr.mxu0 0.0
    %662 = vmatpush1.msra.mxu0 0.0
    %663 = vmatprep.subr.mxu0 0.0
    %664 = vmatpush1.msra.mxu0 0.0
    %665 = vmatprep.subr.mxu0 0.0
    %666 = vmatpush1.msra.mxu0 0.0
    %667 = vmatprep.subr.mxu0 0.0
    %668 = vmatpush1.msra.mxu0 0.0
    %669 = vmatprep.subr.mxu0 0.0
    %670 = vmatpush1.msra.mxu0 0.0
    %671 = vmatprep.subr.mxu0 0.0
    %672 = vmatpush1.msra.mxu0 0.0
    %673 = vmatprep.subr.mxu0 0.0
    %674 = vmatpush1.msra.mxu0 0.0
    %675 = vmatprep.mubr.f32.mxu0 0.0
    %676 = vmatmul.mubr.f32.gmra.mrb[0].mxu0 %v606
    %v677 = vpop.f32.mrb[0].mxu0
    %v678 = vadd.f32 %v598, %v677
    %v679 = vpop.f32.mrb[0].mxu0
    %v680 = vadd.f32 %v598, %v679
    %681 = vmatprep.mubr.f32.mxu0 0.0
    %682 = vmatmul.mubr.f32.gmra.mrb[0].mxu0 %v609
    %v683 = vpop.f32.mrb[0].mxu0
    %v684 = vadd.f32 %v603, %v683
    %v685 = vpop.f32.mrb[0].mxu0
    %v686 = vadd.f32 %v603, %v685
    %687 = vdwg.mxu0
    %v688 = vmax.f32 %v678, 0.0
    %v689 = vmax.f32 %v680, 0.0
    %v690 = vmax.f32 %v684, 0.0
    %v691 = vmax.f32 %v686, 0.0
    %v692 = vadd.f32 %v688, 1e-06
    %v693 = vadd.f32 %v689, 1e-06
    %v694 = vadd.f32 %v690, 1e-06
    %v695 = vadd.f32 %v691, 1e-06
    %v697 = vlaneseq
    %v698 = vshrl.u32 %v697, 7
    %v699 = vsub.s32 0, %v698
    %v700 = vrot.slane %v574, %v699
    %v701 = vlaneseq
    %v702 = vshrl.u32 %v701, 7
    %v703 = vsub.s32 1, %v702
    %v704 = vrot.slane %v574, %v703
    %v707 = vadd.f32 %v692, %v700
    %v708 = vadd.f32 %v693, %v704
    %v709 = vadd.f32 %v694, %v700
    %v710 = vadd.f32 %v695, %v704
    %v711 = vrcp.pop %v707
    %v712 = vmul.f32 %v692, %v711
    %v713 = vrcp.pop %v708
    %v714 = vmul.f32 %v693, %v713
    %v715 = vrcp.pop %v709
    %v716 = vmul.f32 %v694, %v715
    %v717 = vrcp.pop %v710
    %v718 = vmul.f32 %v695, %v717
    %v719 = vadd.f32 %v712, %v716
    %v720 = vrot.slane %v719, 4
    %v721 = vadd.f32 %v719, %v720
    %v722 = vrot.slane %v721, 2
    %v723 = vadd.f32 %v721, %v722
    %v724 = vrot.slane %v723, 1
    %v725 = vadd.f32 %v723, %v724
    %v726 = vadd.f32 %v714, %v718
    %v727 = vrot.slane %v726, 4
    %v728 = vadd.f32 %v726, %v727
    %v729 = vrot.slane %v728, 2
    %v730 = vadd.f32 %v728, %v729
    %v731 = vrot.slane %v730, 1
    %v732 = vadd.f32 %v730, %v731
    %vm733 = vcmp.gt.f32.partialorder %v725, 8.0
    %vm734 = vcmp.gt.f32.partialorder %v732, 8.0
    %v735 = vsel %vm733, 1.0, 0.0
    %v736 = vsel %vm734, 1.0, 0.0
    %v739 = vcombine.low %v735, %v736
    %v741 = vunpack.c.l.s4 1966171168
    %v742 = vunpack.c.0.s8 %v741
    %v743 = vlaneseq
    %v744 = vshrl.u32 %v743, 7
    %v745 = vsub.s32 %v742, %v744
    %v746 = vrot.slane %v739, %v745
    %v748 = vunpack.c.l.s4 1966171168
    %v749 = vunpack.c.0.s8 %v748
    %v750 = vlaneseq
    %v751 = vshrl.u32 %v750, 7
    %v752 = vsub.s32 %v749, %v751
    %v753 = vrot.slane %v746, %v752
    %vm755 = vcmp.lt.s32.totalorder %v388, 256
    %vm756 = vmand %vm389, %vm755
    %757 = vst.msk [vmem:[#allocation12] sm:$0x3] %vm756, %v753
    %v758 = vmul.f32 %v725, 0.0625
    %v759 = vmul.f32 %v732, 0.0625
    %v762 = vcombine.low %v758, %v759
    %v764 = vunpack.c.l.s4 1966171168
    %v765 = vunpack.c.0.s8 %v764
    %v766 = vlaneseq
    %v767 = vshrl.u32 %v766, 7
    %v768 = vsub.s32 %v765, %v767
    %v769 = vrot.slane %v762, %v768
    %v771 = vunpack.c.l.s4 1966171168
    %v772 = vunpack.c.0.s8 %v771
    %v773 = vlaneseq
    %v774 = vshrl.u32 %v773, 7
    %v775 = vsub.s32 %v772, %v774
    %v776 = vrot.slane %v769, %v775
    %778 = vst.msk [vmem:[#allocation13] sm:$0x3] %vm756, %v776
    // Predicated region
    $region58: #{tpu_custom_call.1} parent=1 // pred_check
      _
    $region59: #{tpu_custom_call.1} parent=1 // pred_check_branch
      %780 = sbr.rel (0) target = $region61
    $region60: #{tpu_custom_call.1} parent=1 // pred_region
      %s782 = ssub.s32 32, 32
      %783 = vsyncadd [#allocation5], %s782
      %s785 = sshll.u32 [#allocation12], 4
      %s786 = int_to_ptr.vmem [resolvable:$true] %s785
      %788 = dma.vmem_to_hbm [thread:$0]  %s786, 32, %s9, [#allocation5]
    $region61: #{tpu_custom_call.1} parent=1 // pred_fallthru
      _
    // Predicated region
    $region62: #{tpu_custom_call.1} parent=1 // pred_check
      _
    $region63: #{tpu_custom_call.1} parent=1 // pred_check_branch
      %790 = sbr.rel (0) target = $region65
    $region64: #{tpu_custom_call.1} parent=1 // pred_region
      %s792 = ssub.s32 32, 32
      %793 = vsyncadd [#allocation14], %s792
      %s795 = sshll.u32 [#allocation13], 4
      %s796 = int_to_ptr.vmem [resolvable:$true] %s795
      %798 = dma.vmem_to_hbm [thread:$0]  %s796, 32, %s10, [#allocation14]
    $region65: #{tpu_custom_call.1} parent=1 // pred_fallthru
      _
    // Predicated region
    $region66: #{tpu_custom_call.1} parent=1 // pred_check
      _
    $region67: #{tpu_custom_call.1} parent=1 // pred_check_branch
      %800 = sbr.rel (0) target = $region69
    $region68: #{tpu_custom_call.1} parent=1 // pred_region
      %801 = dma.done [#allocation5], 32
    $region69: #{tpu_custom_call.1} parent=1 // pred_fallthru
      _
    // Predicated region
    $region70: #{tpu_custom_call.1} parent=1 // pred_check
      _
    $region71: #{tpu_custom_call.1} parent=1 // pred_check_branch
      %803 = sbr.rel (0) target = $region73
    $region72: #{tpu_custom_call.1} parent=1 // pred_region
      %804 = dma.done [#allocation14], 32
    $region73: #{tpu_custom_call.1} parent=1 // pred_fallthru
      _
    %805 = vsyncpa [#allocation4], 1
    %806 = vsyncpa [#allocation7], 1
    %807 = vsyncpa [#allocation10], 1
    %808 = vsyncpa [#allocation5], 1
    %809 = vsyncpa [#allocation14], 1

</llo_original>
